<compile_context>
chip_gen: v7x
topology: tpu7x:2x2x1
jax: 0.10.0
libtpu: 0.0.40
codegen_flags: <defaults>
</compile_context>

<pallas_src>
import jax
import jax.numpy as jnp
from jax.experimental import pallas as pl
from jax.experimental.pallas import tpu as pltpu


def _round_up(n, m):
    return ((n + m - 1) // m) * m


def _mlp_kernel(x_ref, w1_ref, b1_ref, w2_ref, b2_ref, o_ref):
    # x:  (TM, D_in)    w1: (D_in, H1)    b1: (1, H1)
    # w2: (H1, D_out)   b2: (1, D_out)    o:  (TM, D_out)
    x = x_ref[...].astype(jnp.float32)
    w1 = w1_ref[...].astype(jnp.float32)
    d_in = x_ref.shape[1]

    # Layer 1 as D_in rank-1 VPU updates (tiny contraction dim).
    h = x[:, 0:1] * w1[0:1, :]
    for k in range(1, d_in):
        h = h + x[:, k:k + 1] * w1[k:k + 1, :]
    h = h + b1_ref[...].astype(jnp.float32)      # bias broadcast (1, H1)
    h = jnp.maximum(h, 0.0)                      # ReLU, f32 on the VPU

    # Layer 2 on the MXU, f32 accumulate.
    y = jnp.dot(h.astype(w2_ref.dtype), w2_ref[...],
                preferred_element_type=jnp.float32)
    y = y + b2_ref[...].astype(jnp.float32)
    o_ref[...] = y.astype(o_ref.dtype)


def nonlinear_model_forward(x, w1, b1, w2, b2, *, block_rows=2048):
    """x: (B, D_in); w1: (D_in, H1); b1: (H1,); w2: (H1, D_out); b2: (D_out,)."""
    B, D_in = x.shape
    H1 = w1.shape[1]
    D_out = w2.shape[1]

    # Cheap 2-D views of the tiny biases (no activation-sized copies anywhere).
    b1_2d = b1.reshape(1, H1)
    b2_2d = b2.reshape(1, D_out)

    # Batch tile: multiple of 8, at most block_rows, and no larger than ~B/2 so
    # the parallel grid has >= 2 steps (v7x megacore).  No padding of x or the
    # output: pl.cdiv handles the ragged last tile.
    TM = max(8, min(block_rows, _round_up(pl.cdiv(B, 2), 8)))
    grid = (pl.cdiv(B, TM),)

    itemsize = jnp.dtype(x.dtype).itemsize
    flops = 2 * B * (D_in * H1 + H1 * D_out)
    bytes_accessed = (
        x.size * itemsize
        + w1.size * jnp.dtype(w1.dtype).itemsize
        + b1.size * jnp.dtype(b1.dtype).itemsize
        + w2.size * jnp.dtype(w2.dtype).itemsize
        + b2.size * jnp.dtype(b2.dtype).itemsize
        + B * D_out * itemsize)

    return pl.pallas_call(
        _mlp_kernel,
        out_shape=jax.ShapeDtypeStruct((B, D_out), x.dtype),
        grid=grid,
        in_specs=[
            pl.BlockSpec((TM, D_in), lambda i: (i, 0)),    # x: tiled over batch
            pl.BlockSpec((D_in, H1), lambda i: (0, 0)),    # w1: resident
            pl.BlockSpec((1, H1), lambda i: (0, 0)),       # b1: resident
            pl.BlockSpec((H1, D_out), lambda i: (0, 0)),   # w2: resident
            pl.BlockSpec((1, D_out), lambda i: (0, 0)),    # b2: resident
        ],
        out_specs=pl.BlockSpec((TM, D_out), lambda i: (i, 0)),
        compiler_params=pltpu.CompilerParams(
            dimension_semantics=("parallel",),   # v7x: batch tiles across 2 TCs
            vmem_limit_bytes=32 * 1024 * 1024,   # tiles fit easily; headroom only
        ),
        cost_estimate=pl.CostEstimate(
            flops=flops, transcendentals=0, bytes_accessed=bytes_accessed),
    )(x, w1, b1_2d, w2, b2_2d)


def init_params(key, input_size, H1, output_size, dtype=jnp.float32):
    """Deterministic init mimicking nn.Linear's uniform(-1/sqrt(in), 1/sqrt(in))."""
    k1, k2, k3, k4 = jax.random.split(key, 4)
    bound1 = 1.0 / jnp.sqrt(jnp.array(input_size, dtype))
    bound2 = 1.0 / jnp.sqrt(jnp.array(H1, dtype))
    # Stored as (in, out): transpose of PyTorch's (out, in) weight.
    w1 = jax.random.uniform(k1, (input_size, H1), dtype, -bound1, bound1)
    b1 = jax.random.uniform(k2, (H1,), dtype, -bound1, bound1)
    w2 = jax.random.uniform(k3, (H1, output_size), dtype, -bound2, bound2)
    b2 = jax.random.uniform(k4, (output_size,), dtype, -bound2, bound2)
    return w1, b1, w2, b2


def reference_forward(x, w1, b1, w2, b2):
    h = jnp.maximum(x @ w1 + b1, 0.0)
    return h @ w2 + b2


if __name__ == "__main__":
    key = jax.random.PRNGKey(0)
    k_in, k_in2, k_params = jax.random.split(key, 3)

    # Small shapes consistent with the module: input_size=4, H1=32, output_size=2.
    batch, input_size, H1, output_size = 8, 4, 32, 2

    x = jax.random.normal(k_in, (batch, input_size), jnp.float32)
    w1, b1, w2, b2 = init_params(k_params, input_size, H1, output_size)

    yhat = jax.block_until_ready(nonlinear_model_forward(x, w1, b1, w2, b2))
    ref = reference_forward(x, w1, b1, w2, b2)
    assert yhat.shape == (batch, output_size)
    assert jnp.allclose(yhat, ref, atol=1e-4, rtol=1e-4)

    # Secondary check: batch needing several tiles AND a ragged last tile
    # (exercises the multi-step grid, the megacore split, and the unpadded
    # edge-block handling without any wrapper-side copies).
    batch2 = 4100
    x2 = jax.random.normal(k_in2, (batch2, input_size), jnp.float32)
    yhat2 = jax.block_until_ready(nonlinear_model_forward(x2, w1, b1, w2, b2))
    ref2 = reference_forward(x2, w1, b1, w2, b2)
    assert yhat2.shape == (batch2, output_size)
    assert jnp.allclose(yhat2, ref2, atol=1e-4, rtol=1e-4)

    print("KERNEL_OK")
</pallas_src>

<mosaic_0001>
module attributes {stable_mosaic.version = 11 : i64} {
  func.func @_mlp_kernel(%arg0: i32, %arg1: memref<8x4xf32, #tpu.memory_space<vmem>>, %arg2: memref<4x32xf32, #tpu.memory_space<vmem>>, %arg3: memref<1x32xf32, #tpu.memory_space<vmem>>, %arg4: memref<32x2xf32, #tpu.memory_space<vmem>>, %arg5: memref<1x2xf32, #tpu.memory_space<vmem>>, %arg6: memref<8x2xf32, #tpu.memory_space<vmem>>) attributes {dimension_semantics = [#tpu.dimension_semantics<parallel>], iteration_bounds = array<i64: 1>, scalar_prefetch = 0 : i64, scratch_operands = 0 : i64, tpu.core_type = #tpu.core_type<tc>, window_params = [{transform_indices = @transform_0, window_bounds = array<i64: 8, 4>}, {pipeline_mode = #tpu.pipeline_mode<synchronous>, transform_indices = @transform_1, window_bounds = array<i64: 4, 32>}, {pipeline_mode = #tpu.pipeline_mode<synchronous>, transform_indices = @transform_2, window_bounds = array<i64: 1, 32>}, {pipeline_mode = #tpu.pipeline_mode<synchronous>, transform_indices = @transform_3, window_bounds = array<i64: 32, 2>}, {pipeline_mode = #tpu.pipeline_mode<synchronous>, transform_indices = @transform_4, window_bounds = array<i64: 1, 2>}, {transform_indices = @transform_5, window_bounds = array<i64: 8, 2>}]} {
    %c0 = arith.constant 0 : index
    %c0_0 = arith.constant 0 : index
    %0 = vector.load %arg1[%c0, %c0_0] : memref<8x4xf32, #tpu.memory_space<vmem>>, vector<8x4xf32>
    %c0_1 = arith.constant 0 : index
    %c0_2 = arith.constant 0 : index
    %1 = vector.load %arg2[%c0_1, %c0_2] : memref<4x32xf32, #tpu.memory_space<vmem>>, vector<4x32xf32>
    %2 = vector.extract_strided_slice %0 {offsets = [0, 0], sizes = [8, 1], strides = [1, 1]} : vector<8x4xf32> to vector<8x1xf32>
    %3 = vector.extract_strided_slice %1 {offsets = [0, 0], sizes = [1, 32], strides = [1, 1]} : vector<4x32xf32> to vector<1x32xf32>
    %4 = vector.broadcast %2 : vector<8x1xf32> to vector<8x32xf32>
    %5 = vector.broadcast %3 : vector<1x32xf32> to vector<8x32xf32>
    %6 = arith.mulf %4, %5 : vector<8x32xf32>
    %7 = vector.extract_strided_slice %0 {offsets = [0, 1], sizes = [8, 1], strides = [1, 1]} : vector<8x4xf32> to vector<8x1xf32>
    %8 = vector.extract_strided_slice %1 {offsets = [1, 0], sizes = [1, 32], strides = [1, 1]} : vector<4x32xf32> to vector<1x32xf32>
    %9 = vector.broadcast %7 : vector<8x1xf32> to vector<8x32xf32>
    %10 = vector.broadcast %8 : vector<1x32xf32> to vector<8x32xf32>
    %11 = arith.mulf %9, %10 : vector<8x32xf32>
    %12 = arith.addf %6, %11 : vector<8x32xf32>
    %13 = vector.extract_strided_slice %0 {offsets = [0, 2], sizes = [8, 1], strides = [1, 1]} : vector<8x4xf32> to vector<8x1xf32>
    %14 = vector.extract_strided_slice %1 {offsets = [2, 0], sizes = [1, 32], strides = [1, 1]} : vector<4x32xf32> to vector<1x32xf32>
    %15 = vector.broadcast %13 : vector<8x1xf32> to vector<8x32xf32>
    %16 = vector.broadcast %14 : vector<1x32xf32> to vector<8x32xf32>
    %17 = arith.mulf %15, %16 : vector<8x32xf32>
    %18 = arith.addf %12, %17 : vector<8x32xf32>
    %19 = vector.extract_strided_slice %0 {offsets = [0, 3], sizes = [8, 1], strides = [1, 1]} : vector<8x4xf32> to vector<8x1xf32>
    %20 = vector.extract_strided_slice %1 {offsets = [3, 0], sizes = [1, 32], strides = [1, 1]} : vector<4x32xf32> to vector<1x32xf32>
    %21 = vector.broadcast %19 : vector<8x1xf32> to vector<8x32xf32>
    %22 = vector.broadcast %20 : vector<1x32xf32> to vector<8x32xf32>
    %23 = arith.mulf %21, %22 : vector<8x32xf32>
    %24 = arith.addf %18, %23 : vector<8x32xf32>
    %c0_3 = arith.constant 0 : index
    %c0_4 = arith.constant 0 : index
    %25 = vector.load %arg3[%c0_3, %c0_4] : memref<1x32xf32, #tpu.memory_space<vmem>>, vector<1x32xf32>
    %26 = vector.broadcast %25 : vector<1x32xf32> to vector<8x32xf32>
    %27 = arith.addf %24, %26 : vector<8x32xf32>
    %cst = arith.constant 0.000000e+00 : f32
    %28 = vector.broadcast %cst : f32 to vector<8x32xf32>
    %29 = arith.maximumf %27, %28 : vector<8x32xf32>
    %c0_5 = arith.constant 0 : index
    %c0_6 = arith.constant 0 : index
    %30 = vector.load %arg4[%c0_5, %c0_6] : memref<32x2xf32, #tpu.memory_space<vmem>>, vector<32x2xf32>
    %cst_7 = arith.constant dense<0.000000e+00> : vector<8x2xf32>
    %31 = tpu.matmul %29, %30, %cst_7 {dimension_numbers = #tpu.dot_dimension_numbers<[1], [0], [0], [1], [0, 0, 1, 1], [], []>} : vector<8x32xf32>, vector<32x2xf32>, vector<8x2xf32> -> vector<8x2xf32>
    %c0_8 = arith.constant 0 : index
    %c0_9 = arith.constant 0 : index
    %32 = vector.load %arg5[%c0_8, %c0_9] : memref<1x2xf32, #tpu.memory_space<vmem>>, vector<1x2xf32>
    %33 = vector.broadcast %32 : vector<1x2xf32> to vector<8x2xf32>
    %34 = arith.addf %31, %33 : vector<8x2xf32>
    %c0_10 = arith.constant 0 : index
    %c0_11 = arith.constant 0 : index
    %35 = vector.load %arg6[%c0_10, %c0_11] : memref<8x2xf32, #tpu.memory_space<vmem>>, vector<8x2xf32>
    tpu.vector_store %arg6[%c0_10, %c0_11], %34 {strides = array<i32>} : memref<8x2xf32, #tpu.memory_space<vmem>>, vector<8x2xf32>,
    return
  }
  func.func @transform_0(%arg0: i32) -> (i32, i32) {
    %c0_i32 = arith.constant 0 : i32
    %c0_i32_0 = arith.constant 0 : i32
    return %arg0, %c0_i32 : i32, i32
  }
  func.func @transform_1(%arg0: i32) -> (i32, i32) {
    %c0_i32 = arith.constant 0 : i32
    %c0_i32_0 = arith.constant 0 : i32
    %c0_i32_1 = arith.constant 0 : i32
    return %c0_i32, %c0_i32_0 : i32, i32
  }
  func.func @transform_2(%arg0: i32) -> (i32, i32) {
    %c0_i32 = arith.constant 0 : i32
    %c0_i32_0 = arith.constant 0 : i32
    %c0_i32_1 = arith.constant 0 : i32
    return %c0_i32, %c0_i32_0 : i32, i32
  }
  func.func @transform_3(%arg0: i32) -> (i32, i32) {
    %c0_i32 = arith.constant 0 : i32
    %c0_i32_0 = arith.constant 0 : i32
    %c0_i32_1 = arith.constant 0 : i32
    return %c0_i32, %c0_i32_0 : i32, i32
  }
  func.func @transform_4(%arg0: i32) -> (i32, i32) {
    %c0_i32 = arith.constant 0 : i32
    %c0_i32_0 = arith.constant 0 : i32
    %c0_i32_1 = arith.constant 0 : i32
    return %c0_i32, %c0_i32_0 : i32, i32
  }
  func.func @transform_5(%arg0: i32) -> (i32, i32) {
    %c0_i32 = arith.constant 0 : i32
    %c0_i32_0 = arith.constant 0 : i32
    return %arg0, %c0_i32 : i32, i32
  }
}

</mosaic_0001>

<llo_original>
// kernel: tpu_custom_call.1
$region0: #{tpu_custom_call.1}
  #allocation0 [shape = 'u32[]', space=smem, size = 0x4, offset = 0x4, fixed_abs, tag = 'smem constant byte address 0x4 - core index']
  #allocation1 [shape = 'u32[144,128]{1,0:T(1,128)}', space=vmem, size = 0x12000, scoped, tag = 'internal scratch']
  %s0 = inlined_call_operand.vmem [shape: f32[8,4], index: 0, kind: input, shape index: {}]
  %s1 = inlined_call_operand.vmem [shape: f32[4,32], index: 1, kind: input, shape index: {}]
  %s2 = inlined_call_operand.vmem [shape: f32[1,32], index: 2, kind: input, shape index: {}]
  %s3 = inlined_call_operand.vmem [shape: f32[32,2], index: 3, kind: input, shape index: {}]
  %s4 = inlined_call_operand.vmem [shape: f32[1,2], index: 4, kind: input, shape index: {}]
  %s5 = inlined_call_operand.vmem [shape: f32[8,2], index: 5, kind: output, shape index: {}]
  %s6 = sld [smem:[#allocation0]]
  $region30: #{tpu_custom_call.1} parent=0
    _
  %s8 = ssub.s32 1, %s6
  %s9 = scalar_select 0, %s8, %s6
  // Predicated region
  $region2: #{tpu_custom_call.1} parent=0 // pred_check
    _
  $region3: #{tpu_custom_call.1} parent=0 // pred_check_branch
    %11 = sbr.rel (0) target = $region5
  $region4: #{tpu_custom_call.1} parent=0 // pred_region
    _
  $region5: #{tpu_custom_call.1} parent=0 // pred_fallthru
    _
  // Predicated region
  $region6: #{tpu_custom_call.1} parent=0 // pred_check
    _
  $region7: #{tpu_custom_call.1} parent=0 // pred_check_branch
    %13 = sbr.rel (0) target = $region9
  $region8: #{tpu_custom_call.1} parent=0 // pred_region
    _
  $region9: #{tpu_custom_call.1} parent=0 // pred_fallthru
    _
  // Predicated region
  $region10: #{tpu_custom_call.1} parent=0 // pred_check
    _
  $region11: #{tpu_custom_call.1} parent=0 // pred_check_branch
    %15 = sbr.rel (0) target = $region13
  $region12: #{tpu_custom_call.1} parent=0 // pred_region
    _
  $region13: #{tpu_custom_call.1} parent=0 // pred_fallthru
    _
  // Predicated region
  $region14: #{tpu_custom_call.1} parent=0 // pred_check
    _
  $region15: #{tpu_custom_call.1} parent=0 // pred_check_branch
    %17 = sbr.rel (0) target = $region17
  $region16: #{tpu_custom_call.1} parent=0 // pred_region
    _
  $region17: #{tpu_custom_call.1} parent=0 // pred_fallthru
    _
  // Predicated region
  $region18: #{tpu_custom_call.1} parent=0 // pred_check
    _
  $region19: #{tpu_custom_call.1} parent=0 // pred_check_branch
    %19 = sbr.rel (0) target = $region21
  $region20: #{tpu_custom_call.1} parent=0 // pred_region
    _
  $region21: #{tpu_custom_call.1} parent=0 // pred_fallthru
    _
  %v20 = vld [vmem:[%s0] sm:$0xff]
  %v21 = vld [vmem:[%s1] sm:$0xf]
  %23 = vset.pattern.permute.xlu0 0
  %24 = vperm.xlu0 %23, %v20
  %v25 = vpop.permute.xlu0 %24
  %v27 = vlaneseq
  %v28 = vshrl.u32 %v27, 7
  %v29 = vsub.s32 0, %v28
  %v30 = vrot.slane %v21, %v29
  %v31 = vmul.f32 %v25, %v30
  %32 = vset.pattern.permute.xlu0 1
  %33 = vperm.xlu0 %32, %v20
  %v34 = vpop.permute.xlu0 %33
  %v36 = vlaneseq
  %v37 = vshrl.u32 %v36, 7
  %v38 = vsub.s32 1, %v37
  %v39 = vrot.slane %v21, %v38
  %v40 = vmul.f32 %v34, %v39
  %v41 = vadd.f32 %v31, %v40
  %42 = vset.pattern.permute.xlu0 2
  %43 = vperm.xlu0 %42, %v20
  %v44 = vpop.permute.xlu0 %43
  %v46 = vlaneseq
  %v47 = vshrl.u32 %v46, 7
  %v48 = vsub.s32 2, %v47
  %v49 = vrot.slane %v21, %v48
  %v50 = vmul.f32 %v44, %v49
  %v51 = vadd.f32 %v41, %v50
  %52 = vset.pattern.permute.xlu0 3
  %53 = vperm.xlu0 %52, %v20
  %v54 = vpop.permute.xlu0 %53
  %v56 = vlaneseq
  %v57 = vshrl.u32 %v56, 7
  %v58 = vsub.s32 3, %v57
  %v59 = vrot.slane %v21, %v58
  %v60 = vmul.f32 %v54, %v59
  %v61 = vadd.f32 %v51, %v60
  %v62 = vld [vmem:[%s2] sm:$0x1]
  %v64 = vlaneseq
  %v65 = vshrl.u32 %v64, 7
  %v66 = vsub.s32 0, %v65
  %v67 = vrot.slane %v62, %v66
  %v69 = vadd.f32 %v61, %v67
  %v70 = vmax.f32 %v69, 0.0
  %v71 = vld [vmem:[%s3] sm:$0xff]
  %v72 = vld [vmem:[%s3 + $0x8] sm:$0xff]
  %v73 = vld [vmem:[%s3 + $0x10] sm:$0xff]
  %v74 = vld [vmem:[%s3 + $0x18] sm:$0xff]
  %v75 = vld [vmem:[%s4] sm:$0x1]
  %v77 = vlaneseq
  %v78 = vshrl.u32 %v77, 7
  %v79 = vsub.s32 0, %v78
  %v80 = vrot.slane %v75, %v79
  %vm82 = vcmask 261120
  %v84 = vsel %vm82, %v70, 0
  %86 = vmatprep.subr.mxu0 0.0
  %87 = vmatpush1.msra.mxu0 %v71
  %88 = vmatprep.subr.mxu0 0.0
  %89 = vmatpush1.msra.mxu0 %v72
  %90 = vmatprep.subr.mxu0 0.0
  %91 = vmatpush1.msra.mxu0 %v73
  %92 = vmatprep.subr.mxu0 0.0
  %93 = vmatpush1.msra.mxu0 %v74
  %94 = vmatprep.subr.mxu0 0.0
  %95 = vmatpush1.msra.mxu0 0.0
  %96 = vmatprep.subr.mxu0 0.0
  %97 = vmatpush1.msra.mxu0 0.0
  %98 = vmatprep.subr.mxu0 0.0
  %99 = vmatpush1.msra.mxu0 0.0
  %100 = vmatprep.subr.mxu0 0.0
  %101 = vmatpush1.msra.mxu0 0.0
  %102 = vmatprep.subr.mxu0 0.0
  %103 = vmatpush1.msra.mxu0 0.0
  %104 = vmatprep.subr.mxu0 0.0
  %105 = vmatpush1.msra.mxu0 0.0
  %106 = vmatprep.subr.mxu0 0.0
  %107 = vmatpush1.msra.mxu0 0.0
  %108 = vmatprep.subr.mxu0 0.0
  %109 = vmatpush1.msra.mxu0 0.0
  %110 = vmatprep.subr.mxu0 0.0
  %111 = vmatpush1.msra.mxu0 0.0
  %112 = vmatprep.subr.mxu0 0.0
  %113 = vmatpush1.msra.mxu0 0.0
  %114 = vmatprep.subr.mxu0 0.0
  %115 = vmatpush1.msra.mxu0 0.0
  %116 = vmatprep.subr.mxu0 0.0
  %117 = vmatpush1.msra.mxu0 0.0
  %118 = vmatprep.subr.mxu0 0.0
  %119 = vmatpush1.msra.mxu0 0.0
  %120 = vmatprep.subr.mxu0 0.0
  %121 = vmatpush1.msra.mxu0 0.0
  %122 = vmatprep.subr.mxu0 0.0
  %123 = vmatpush1.msra.mxu0 0.0
  %124 = vmatprep.subr.mxu0 0.0
  %125 = vmatpush1.msra.mxu0 0.0
  %126 = vmatprep.subr.mxu0 0.0
  %127 = vmatpush1.msra.mxu0 0.0
  %128 = vmatprep.subr.mxu0 0.0
  %129 = vmatpush1.msra.mxu0 0.0
  %130 = vmatprep.subr.mxu0 0.0
  %131 = vmatpush1.msra.mxu0 0.0
  %132 = vmatprep.subr.mxu0 0.0
  %133 = vmatpush1.msra.mxu0 0.0
  %134 = vmatprep.subr.mxu0 0.0
  %135 = vmatpush1.msra.mxu0 0.0
  %136 = vmatprep.subr.mxu0 0.0
  %137 = vmatpush1.msra.mxu0 0.0
  %138 = vmatprep.subr.mxu0 0.0
  %139 = vmatpush1.msra.mxu0 0.0
  %140 = vmatprep.subr.mxu0 0.0
  %141 = vmatpush1.msra.mxu0 0.0
  %142 = vmatprep.subr.mxu0 0.0
  %143 = vmatpush1.msra.mxu0 0.0
  %144 = vmatprep.subr.mxu0 0.0
  %145 = vmatpush1.msra.mxu0 0.0
  %146 = vmatprep.subr.mxu0 0.0
  %147 = vmatpush1.msra.mxu0 0.0
  %148 = vmatprep.subr.mxu0 0.0
  %149 = vmatpush1.msra.mxu0 0.0
  %150 = vmatprep.mubr.f32.mxu0 0.0
  %151 = vmatmul.mubr.f32.gmra.mrb[0].mxu0 %v84
  %v152 = vpop.f32.mrb[0].mxu0
  %v153 = vadd.f32 %v80, %v152
  %v154 = vpop.f32.mrb[0].mxu0
  %155 = vdwg.mxu0
  %vm156 = vcmask 15360
  %157 = vst.msk [vmem:[%s5] sm:$0xff] %vm156, %v153
  // Predicated region
  $region22: #{tpu_custom_call.1} parent=0 // pred_check
    _
  $region23: #{tpu_custom_call.1} parent=0 // pred_check_branch
    %159 = sbr.rel (0) target = $region25
  $region24: #{tpu_custom_call.1} parent=0 // pred_region
    _
  $region25: #{tpu_custom_call.1} parent=0 // pred_fallthru
    _
  // Predicated region
  $region26: #{tpu_custom_call.1} parent=0 // pred_check
    _
  $region27: #{tpu_custom_call.1} parent=0 // pred_check_branch
    %161 = sbr.rel (0) target = $region29
  $region28: #{tpu_custom_call.1} parent=0 // pred_region
    _
  $region29: #{tpu_custom_call.1} parent=0 // pred_fallthru
    _

</llo_original>
